<compile_context>
chip_gen: v6e
topology: v6e:2x2x1
jax: 0.10.0
libtpu: 0.0.40
codegen_flags: <defaults>
</compile_context>

<pallas_src>
import jax
import jax.numpy as jnp
from jax.experimental import pallas as pl
from jax.experimental.pallas import tpu as pltpu


def _ceil_to(x: int, m: int) -> int:
    return ((x + m - 1) // m) * m


def _simclr_kernel(x_ref, wenc_ref, wfold_ref, w2_ref, out_ref):
    """One row-tile of the fused encoder + projector.

    x_ref:     (TILE_B, Dp)   flattened (zero-padded) images
    wenc_ref:  (Dp, HP)       encoder weight, zero-padded to lane width
    wfold_ref: (Dp, HP)       w_enc @ w1 (projector L1 folded into encoder)
    w2_ref:    (HP, ZP)       projector second linear, zero-padded
    out_ref:   (TILE_B, HP+ZP) packed [h | z] lane-dense output slab
    """
    hp = wenc_ref.shape[1]
    x = x_ref[...]
    # h = x @ W_enc                       (independent matmul, full K depth)
    h = jnp.dot(x, wenc_ref[...], preferred_element_type=jnp.float32)
    # p = relu(x @ (W_enc @ W1))          (fold removes serial h -> p dep)
    p = jnp.maximum(
        jnp.dot(x, wfold_ref[...], preferred_element_type=jnp.float32), 0.0
    )
    # z = p @ W2
    z = jnp.dot(p, w2_ref[...], preferred_element_type=jnp.float32)
    # 128-lane-aligned slab writes -> unmasked vst.
    out_ref[:, :hp] = h.astype(out_ref.dtype)
    out_ref[:, hp:] = z.astype(out_ref.dtype)


def simclr_forward(x_i, x_j, params):
    """x_i, x_j: NCHW (B, 1, 25, 25) float32. Returns (h_i, h_j, z_i, z_j)."""
    B = x_i.shape[0]
    w_enc, w1, w2 = params["w_enc"], params["w1"], params["w2"]
    D_in, H = w_enc.shape
    Z = w2.shape[1]

    # Fuse both views into one batch of rows (one pallas_call for everything).
    x_all = jnp.concatenate(
        [x_i.reshape(B, -1), x_j.reshape(B, -1)], axis=0
    ).astype(jnp.float32)                                   # (2B, D_in)

    # Fold projector's first (bias-free) linear through the bias-free encoder.
    w_fold = jnp.dot(w_enc, w1)                              # (D_in, H)

    # Lane/sublane-dense padding (zeros -> numerically inert).
    LANE, TILE_B = 128, 8
    Dp = _ceil_to(D_in, LANE)            # 625 -> 640
    HP = _ceil_to(max(H, 1), LANE)       # 32  -> 128
    ZP = _ceil_to(max(Z, 1), LANE)       # 16  -> 128
    rows = 2 * B
    Rp = _ceil_to(rows, TILE_B)

    x_p = jnp.zeros((Rp, Dp), jnp.float32).at[:rows, :D_in].set(x_all)
    w_enc_p = jnp.zeros((Dp, HP), jnp.float32).at[:D_in, :H].set(w_enc)
    w_fold_p = jnp.zeros((Dp, HP), jnp.float32).at[:D_in, :H].set(w_fold)
    w2_p = jnp.zeros((HP, ZP), jnp.float32).at[:H, :Z].set(w2)

    grid = (Rp // TILE_B,)
    flops = 2 * rows * (D_in * H * 2 + H * Z)
    bytes_accessed = 4 * (Rp * Dp + 2 * Dp * HP + HP * ZP + Rp * (HP + ZP))

    out = pl.pallas_call(
        _simclr_kernel,
        out_shape=jax.ShapeDtypeStruct((Rp, HP + ZP), jnp.float32),
        grid_spec=pltpu.PrefetchScalarGridSpec(
            num_scalar_prefetch=0,
            grid=grid,
            in_specs=[
                pl.BlockSpec((TILE_B, Dp), lambda i: (i, 0)),   # x rows
                pl.BlockSpec((Dp, HP), lambda i: (0, 0)),       # w_enc (resident)
                pl.BlockSpec((Dp, HP), lambda i: (0, 0)),       # w_fold (resident)
                pl.BlockSpec((HP, ZP), lambda i: (0, 0)),       # w2 (resident)
            ],
            out_specs=pl.BlockSpec((TILE_B, HP + ZP), lambda i: (i, 0)),
        ),
        compiler_params=pltpu.CompilerParams(
            dimension_semantics=("parallel",),  # shard row tiles across TCs on v7x
        ),
        cost_estimate=pl.CostEstimate(
            flops=flops, transcendentals=0, bytes_accessed=bytes_accessed
        ),
    )(x_p, w_enc_p, w_fold_p, w2_p)

    # Wrapper-side slicing back to the logical shapes (layout plumbing only).
    h_all = out[:rows, :H]
    z_all = out[:rows, HP:HP + Z]
    h_i, h_j = h_all[:B], h_all[B:]
    z_i, z_j = z_all[:B], z_all[B:]
    return h_i, h_j, z_i, z_j


def init_params(key, d_in, h_size, z_size):
    k_enc, k1, k2 = jax.random.split(key, 3)
    # deterministic synthetic weights (nn.Linear-style scale, bias=False)
    w_enc = jax.random.normal(k_enc, (d_in, h_size), jnp.float32) / jnp.sqrt(d_in)
    w1 = jax.random.normal(k1, (h_size, h_size), jnp.float32) / jnp.sqrt(h_size)
    w2 = jax.random.normal(k2, (h_size, z_size), jnp.float32) / jnp.sqrt(h_size)
    return {"w_enc": w_enc, "w1": w1, "w2": w2}


if __name__ == "__main__":
    # Small shapes consistent with the module docstring: B x 25 x 25 x 1 input.
    B, H_IMG, W_IMG = 4, 25, 25
    H_SIZE, Z_SIZE = 32, 16
    D_IN = H_IMG * W_IMG  # 625

    key = jax.random.PRNGKey(0)
    k_xi, k_xj, k_p = jax.random.split(key, 3)
    x_i = jax.random.normal(k_xi, (B, 1, H_IMG, W_IMG), jnp.float32)  # NCHW
    x_j = jax.random.normal(k_xj, (B, 1, H_IMG, W_IMG), jnp.float32)  # NCHW

    params = init_params(k_p, D_IN, H_SIZE, Z_SIZE)

    h_i, h_j, z_i, z_j = simclr_forward(x_i, x_j, params)
    jax.block_until_ready((h_i, h_j, z_i, z_j))

    # reference check in plain JAX (unfolded projector)
    def ref_branch(x):
        h = x.reshape(B, -1) @ params["w_enc"]
        z = jnp.maximum(h @ params["w1"], 0.0) @ params["w2"]
        return h, z

    rh_i, rz_i = ref_branch(x_i)
    rh_j, rz_j = ref_branch(x_j)
    assert h_i.shape == (B, H_SIZE) and z_i.shape == (B, Z_SIZE)
    assert h_j.shape == (B, H_SIZE) and z_j.shape == (B, Z_SIZE)
    assert jnp.allclose(h_i, rh_i, atol=1e-4, rtol=1e-4)
    assert jnp.allclose(h_j, rh_j, atol=1e-4, rtol=1e-4)
    assert jnp.allclose(z_i, rz_i, atol=1e-4, rtol=1e-4)
    assert jnp.allclose(z_j, rz_j, atol=1e-4, rtol=1e-4)

    print("KERNEL_OK")
</pallas_src>

<mosaic_0001>
module attributes {stable_mosaic.version = 11 : i64} {
  func.func @_simclr_kernel(%arg0: i32, %arg1: memref<8x640xf32, #tpu.memory_space<vmem>>, %arg2: memref<640x128xf32, #tpu.memory_space<vmem>>, %arg3: memref<640x128xf32, #tpu.memory_space<vmem>>, %arg4: memref<128x128xf32, #tpu.memory_space<vmem>>, %arg5: memref<8x256xf32, #tpu.memory_space<vmem>>) attributes {dimension_semantics = [#tpu.dimension_semantics<parallel>], iteration_bounds = array<i64: 1>, scalar_prefetch = 0 : i64, scratch_operands = 0 : i64, tpu.core_type = #tpu.core_type<tc>, window_params = [{transform_indices = @transform_0, window_bounds = array<i64: 8, 640>}, {pipeline_mode = #tpu.pipeline_mode<synchronous>, transform_indices = @transform_1, window_bounds = array<i64: 640, 128>}, {pipeline_mode = #tpu.pipeline_mode<synchronous>, transform_indices = @transform_2, window_bounds = array<i64: 640, 128>}, {pipeline_mode = #tpu.pipeline_mode<synchronous>, transform_indices = @transform_3, window_bounds = array<i64: 128, 128>}, {transform_indices = @transform_4, window_bounds = array<i64: 8, 256>}]} {
    %c0 = arith.constant 0 : index
    %c0_0 = arith.constant 0 : index
    %0 = vector.load %arg1[%c0, %c0_0] : memref<8x640xf32, #tpu.memory_space<vmem>>, vector<8x640xf32>
    %c0_1 = arith.constant 0 : index
    %c0_2 = arith.constant 0 : index
    %1 = vector.load %arg2[%c0_1, %c0_2] : memref<640x128xf32, #tpu.memory_space<vmem>>, vector<640x128xf32>
    %cst = arith.constant dense<0.000000e+00> : vector<8x128xf32>
    %2 = tpu.matmul %0, %1, %cst {dimension_numbers = #tpu.dot_dimension_numbers<[1], [0], [0], [1], [0, 0, 1, 1], [], []>} : vector<8x640xf32>, vector<640x128xf32>, vector<8x128xf32> -> vector<8x128xf32>
    %c0_3 = arith.constant 0 : index
    %c0_4 = arith.constant 0 : index
    %3 = vector.load %arg3[%c0_3, %c0_4] : memref<640x128xf32, #tpu.memory_space<vmem>>, vector<640x128xf32>
    %cst_5 = arith.constant dense<0.000000e+00> : vector<8x128xf32>
    %4 = tpu.matmul %0, %3, %cst_5 {dimension_numbers = #tpu.dot_dimension_numbers<[1], [0], [0], [1], [0, 0, 1, 1], [], []>} : vector<8x640xf32>, vector<640x128xf32>, vector<8x128xf32> -> vector<8x128xf32>
    %cst_6 = arith.constant 0.000000e+00 : f32
    %5 = vector.broadcast %cst_6 : f32 to vector<8x128xf32>
    %6 = arith.maximumf %4, %5 : vector<8x128xf32>
    %c0_7 = arith.constant 0 : index
    %c0_8 = arith.constant 0 : index
    %7 = vector.load %arg4[%c0_7, %c0_8] : memref<128x128xf32, #tpu.memory_space<vmem>>, vector<128x128xf32>
    %cst_9 = arith.constant dense<0.000000e+00> : vector<8x128xf32>
    %8 = tpu.matmul %6, %7, %cst_9 {dimension_numbers = #tpu.dot_dimension_numbers<[1], [0], [0], [1], [0, 0, 1, 1], [], []>} : vector<8x128xf32>, vector<128x128xf32>, vector<8x128xf32> -> vector<8x128xf32>
    %c0_10 = arith.constant 0 : index
    %c0_11 = arith.constant 0 : index
    %9 = vector.load %arg5[%c0_10, %c0_11] : memref<8x256xf32, #tpu.memory_space<vmem>>, vector<8x128xf32>
    tpu.vector_store %arg5[%c0_10, %c0_11], %2 {strides = array<i32>} : memref<8x256xf32, #tpu.memory_space<vmem>>, vector<8x128xf32>,
    %c0_12 = arith.constant 0 : index
    %c128 = arith.constant 128 : index
    %10 = vector.load %arg5[%c0_12, %c128] : memref<8x256xf32, #tpu.memory_space<vmem>>, vector<8x128xf32>
    tpu.vector_store %arg5[%c0_12, %c128], %8 {strides = array<i32>} : memref<8x256xf32, #tpu.memory_space<vmem>>, vector<8x128xf32>,
    return
  }
  func.func @transform_0(%arg0: i32) -> (i32, i32) {
    %c0_i32 = arith.constant 0 : i32
    %c0_i32_0 = arith.constant 0 : i32
    return %arg0, %c0_i32 : i32, i32
  }
  func.func @transform_1(%arg0: i32) -> (i32, i32) {
    %c0_i32 = arith.constant 0 : i32
    %c0_i32_0 = arith.constant 0 : i32
    %c0_i32_1 = arith.constant 0 : i32
    return %c0_i32, %c0_i32_0 : i32, i32
  }
  func.func @transform_2(%arg0: i32) -> (i32, i32) {
    %c0_i32 = arith.constant 0 : i32
    %c0_i32_0 = arith.constant 0 : i32
    %c0_i32_1 = arith.constant 0 : i32
    return %c0_i32, %c0_i32_0 : i32, i32
  }
  func.func @transform_3(%arg0: i32) -> (i32, i32) {
    %c0_i32 = arith.constant 0 : i32
    %c0_i32_0 = arith.constant 0 : i32
    %c0_i32_1 = arith.constant 0 : i32
    return %c0_i32, %c0_i32_0 : i32, i32
  }
  func.func @transform_4(%arg0: i32) -> (i32, i32) {
    %c0_i32 = arith.constant 0 : i32
    %c0_i32_0 = arith.constant 0 : i32
    return %arg0, %c0_i32 : i32, i32
  }
}

</mosaic_0001>

<llo_original>
// kernel: tpu_custom_call.1
$region0: #{tpu_custom_call.1}
  #allocation0 [shape = 'u32[]', space=smem, size = 0x4, offset = 0x4, fixed_abs, tag = 'smem constant byte address 0x4 - core index']
  #allocation1 [shape = 'u32[144,128]{1,0:T(1,128)}', space=vmem, size = 0x12000, scoped, tag = 'internal scratch']
  %s0 = inlined_call_operand.hbm [shape: f32[8,640], index: 0, kind: input, shape index: {}]
  %s1 = inlined_call_operand.hbm [shape: f32[640,128], index: 1, kind: input, shape index: {}]
  %s2 = inlined_call_operand.hbm [shape: f32[640,128], index: 2, kind: input, shape index: {}]
  %s3 = inlined_call_operand.hbm [shape: f32[128,128], index: 3, kind: input, shape index: {}]
  %s4 = inlined_call_operand.hbm [shape: f32[8,256], index: 4, kind: output, shape index: {}]
  %s5 = sld [smem:[#allocation0]]
  $region42: #{tpu_custom_call.1} parent=0
    _
  %s7 = ssub.s32 1, %s5
  %s8 = scalar_select 0, %s7, %s5
  $region1: #{tpu_custom_call.1} parent=0
    #allocation2 [shape = 'u8[20480]{0}', space=vmem, size = 0x5000, scoped, tag = 'input window, operand 0, single buffered']
    #allocation3 [shape = 's32[1]{0}', space=sflag, size = 0x4, scoped, tag = 'scoped memory for tpu_custom_call.1']
    #allocation4 [shape = 's32[1]{0}', space=sflag, size = 0x4, scoped, tag = 'scoped memory for tpu_custom_call.1']
    #allocation5 [shape = 'u8[327680]{0}', space=vmem, size = 0x50000, scoped, tag = 'input window, operand 1, single buffered']
    #allocation6 [shape = 's32[1]{0}', space=sflag, size = 0x4, scoped, tag = 'scoped memory for tpu_custom_call.1']
    #allocation7 [shape = 'u8[327680]{0}', space=vmem, size = 0x50000, scoped, tag = 'input window, operand 2, single buffered']
    #allocation8 [shape = 'u8[65536]{0}', space=vmem, size = 0x10000, scoped, tag = 'input window, operand 3, single buffered']
    #allocation9 [shape = 's32[1]{0}', space=sflag, size = 0x4, scoped, tag = 'scoped memory for tpu_custom_call.1']
    #allocation10 [shape = 'u8[8192]{0}', space=vmem, size = 0x2000, scoped, tag = 'output window, operand 0, single buffered']
    %9 = vsyncpa [#allocation3], 0
    %10 = vsyncpa [#allocation6], 0
    %11 = vsyncpa [#allocation9], 0
    %12 = vsyncpa [#allocation4], 0
    // Predicated region
    $region2: #{tpu_custom_call.1} parent=1 // pred_check
      _
    $region3: #{tpu_custom_call.1} parent=1 // pred_check_branch
      %14 = sbr.rel (0) target = $region5
    $region4: #{tpu_custom_call.1} parent=1 // pred_region
      %s16 = ssub.s32 640, 640
      %17 = vsyncadd [#allocation3], %s16
      %s19 = sshll.u32 [#allocation2], 4
      %s20 = int_to_ptr.vmem [resolvable:$true] %s19
      %22 = dma.hbm_to_vmem [thread:$0]  %s0, 640, %s20, [#allocation3]
    $region5: #{tpu_custom_call.1} parent=1 // pred_fallthru
      _
    // Predicated region
    $region6: #{tpu_custom_call.1} parent=1 // pred_check
      _
    $region7: #{tpu_custom_call.1} parent=1 // pred_check_branch
      %24 = sbr.rel (0) target = $region9
    $region8: #{tpu_custom_call.1} parent=1 // pred_region
      %s26 = ssub.s32 10240, 10240
      %27 = vsyncadd [#allocation6], %s26
      %s28 = sshll.u32 [#allocation5], 4
      %s29 = int_to_ptr.vmem [resolvable:$true] %s28
      %34 = dma.hbm_to_vmem [thread:$0]  %s1, 10240, %s29, [#allocation6], 128, 128, 8
    $region9: #{tpu_custom_call.1} parent=1 // pred_fallthru
      _
    // Predicated region
    $region10: #{tpu_custom_call.1} parent=1 // pred_check
      _
    $region11: #{tpu_custom_call.1} parent=1 // pred_check_branch
      %36 = sbr.rel (0) target = $region13
    $region12: #{tpu_custom_call.1} parent=1 // pred_region
      %s38 = ssub.s32 10240, 10240
      %39 = vsyncadd [#allocation6], %s38
      %s40 = sshll.u32 [#allocation7], 4
      %s41 = int_to_ptr.vmem [resolvable:$true] %s40
      %46 = dma.hbm_to_vmem [thread:$0]  %s2, 10240, %s41, [#allocation6], 128, 128, 8
    $region13: #{tpu_custom_call.1} parent=1 // pred_fallthru
      _
    // Predicated region
    $region14: #{tpu_custom_call.1} parent=1 // pred_check
      _
    $region15: #{tpu_custom_call.1} parent=1 // pred_check_branch
      %48 = sbr.rel (0) target = $region17
    $region16: #{tpu_custom_call.1} parent=1 // pred_region
      %s50 = ssub.s32 2048, 2048
      %51 = vsyncadd [#allocation9], %s50
      %s52 = sshll.u32 [#allocation8], 4
      %s53 = int_to_ptr.vmem [resolvable:$true] %s52
      %58 = dma.hbm_to_vmem [thread:$0]  %s3, 2048, %s53, [#allocation9], 128, 128, 8
    $region17: #{tpu_custom_call.1} parent=1 // pred_fallthru
      _
    // Predicated region
    $region18: #{tpu_custom_call.1} parent=1 // pred_check
      _
    $region19: #{tpu_custom_call.1} parent=1 // pred_check_branch
      %60 = sbr.rel (0) target = $region21
    $region20: #{tpu_custom_call.1} parent=1 // pred_region
      %61 = dma.done [#allocation3], 640
    $region21: #{tpu_custom_call.1} parent=1 // pred_fallthru
      _
    // Predicated region
    $region22: #{tpu_custom_call.1} parent=1 // pred_check
      _
    $region23: #{tpu_custom_call.1} parent=1 // pred_check_branch
      %63 = sbr.rel (0) target = $region25
    $region24: #{tpu_custom_call.1} parent=1 // pred_region
      %64 = dma.done [#allocation6], 10240
    $region25: #{tpu_custom_call.1} parent=1 // pred_fallthru
      _
    // Predicated region
    $region26: #{tpu_custom_call.1} parent=1 // pred_check
      _
    $region27: #{tpu_custom_call.1} parent=1 // pred_check_branch
      %66 = sbr.rel (0) target = $region29
    $region28: #{tpu_custom_call.1} parent=1 // pred_region
      %67 = dma.done [#allocation6], 10240
    $region29: #{tpu_custom_call.1} parent=1 // pred_fallthru
      _
    // Predicated region
    $region30: #{tpu_custom_call.1} parent=1 // pred_check
      _
    $region31: #{tpu_custom_call.1} parent=1 // pred_check_branch
      %69 = sbr.rel (0) target = $region33
    $region32: #{tpu_custom_call.1} parent=1 // pred_region
      %70 = dma.done [#allocation9], 2048
    $region33: #{tpu_custom_call.1} parent=1 // pred_fallthru
      _
    %v71 = vld [vmem:[#allocation2] sm:$0xff]
    %v72 = vld [vmem:[#allocation2 + $0x8] sm:$0xff]
    %v73 = vld [vmem:[#allocation2 + $0x10] sm:$0xff]
    %v74 = vld [vmem:[#allocation2 + $0x18] sm:$0xff]
    %v75 = vld [vmem:[#allocation2 + $0x20] sm:$0xff]
    %v76 = vld [vmem:[#allocation5] sm:$0xff]
    %v77 = vld [vmem:[#allocation5 + $0x8] sm:$0xff]
    %v78 = vld [vmem:[#allocation5 + $0x10] sm:$0xff]
    %v79 = vld [vmem:[#allocation5 + $0x18] sm:$0xff]
    %v80 = vld [vmem:[#allocation5 + $0x20] sm:$0xff]
    %v81 = vld [vmem:[#allocation5 + $0x28] sm:$0xff]
    %v82 = vld [vmem:[#allocation5 + $0x30] sm:$0xff]
    %v83 = vld [vmem:[#allocation5 + $0x38] sm:$0xff]
    %v84 = vld [vmem:[#allocation5 + $0x40] sm:$0xff]
    %v85 = vld [vmem:[#allocation5 + $0x48] sm:$0xff]
    %v86 = vld [vmem:[#allocation5 + $0x50] sm:$0xff]
    %v87 = vld [vmem:[#allocation5 + $0x58] sm:$0xff]
    %v88 = vld [vmem:[#allocation5 + $0x60] sm:$0xff]
    %v89 = vld [vmem:[#allocation5 + $0x68] sm:$0xff]
    %v90 = vld [vmem:[#allocation5 + $0x70] sm:$0xff]
    %v91 = vld [vmem:[#allocation5 + $0x78] sm:$0xff]
    %v92 = vld [vmem:[#allocation5 + $0x80] sm:$0xff]
    %v93 = vld [vmem:[#allocation5 + $0x88] sm:$0xff]
    %v94 = vld [vmem:[#allocation5 + $0x90] sm:$0xff]
    %v95 = vld [vmem:[#allocation5 + $0x98] sm:$0xff]
    %v96 = vld [vmem:[#allocation5 + $0xa0] sm:$0xff]
    %v97 = vld [vmem:[#allocation5 + $0xa8] sm:$0xff]
    %v98 = vld [vmem:[#allocation5 + $0xb0] sm:$0xff]
    %v99 = vld [vmem:[#allocation5 + $0xb8] sm:$0xff]
    %v100 = vld [vmem:[#allocation5 + $0xc0] sm:$0xff]
    %v101 = vld [vmem:[#allocation5 + $0xc8] sm:$0xff]
    %v102 = vld [vmem:[#allocation5 + $0xd0] sm:$0xff]
    %v103 = vld [vmem:[#allocation5 + $0xd8] sm:$0xff]
    %v104 = vld [vmem:[#allocation5 + $0xe0] sm:$0xff]
    %v105 = vld [vmem:[#allocation5 + $0xe8] sm:$0xff]
    %v106 = vld [vmem:[#allocation5 + $0xf0] sm:$0xff]
    %v107 = vld [vmem:[#allocation5 + $0xf8] sm:$0xff]
    %v108 = vld [vmem:[#allocation5 + $0x100] sm:$0xff]
    %v109 = vld [vmem:[#allocation5 + $0x108] sm:$0xff]
    %v110 = vld [vmem:[#allocation5 + $0x110] sm:$0xff]
    %v111 = vld [vmem:[#allocation5 + $0x118] sm:$0xff]
    %v112 = vld [vmem:[#allocation5 + $0x120] sm:$0xff]
    %v113 = vld [vmem:[#allocation5 + $0x128] sm:$0xff]
    %v114 = vld [vmem:[#allocation5 + $0x130] sm:$0xff]
    %v115 = vld [vmem:[#allocation5 + $0x138] sm:$0xff]
    %v116 = vld [vmem:[#allocation5 + $0x140] sm:$0xff]
    %v117 = vld [vmem:[#allocation5 + $0x148] sm:$0xff]
    %v118 = vld [vmem:[#allocation5 + $0x150] sm:$0xff]
    %v119 = vld [vmem:[#allocation5 + $0x158] sm:$0xff]
    %v120 = vld [vmem:[#allocation5 + $0x160] sm:$0xff]
    %v121 = vld [vmem:[#allocation5 + $0x168] sm:$0xff]
    %v122 = vld [vmem:[#allocation5 + $0x170] sm:$0xff]
    %v123 = vld [vmem:[#allocation5 + $0x178] sm:$0xff]
    %v124 = vld [vmem:[#allocation5 + $0x180] sm:$0xff]
    %v125 = vld [vmem:[#allocation5 + $0x188] sm:$0xff]
    %v126 = vld [vmem:[#allocation5 + $0x190] sm:$0xff]
    %v127 = vld [vmem:[#allocation5 + $0x198] sm:$0xff]
    %v128 = vld [vmem:[#allocation5 + $0x1a0] sm:$0xff]
    %v129 = vld [vmem:[#allocation5 + $0x1a8] sm:$0xff]
    %v130 = vld [vmem:[#allocation5 + $0x1b0] sm:$0xff]
    %v131 = vld [vmem:[#allocation5 + $0x1b8] sm:$0xff]
    %v132 = vld [vmem:[#allocation5 + $0x1c0] sm:$0xff]
    %v133 = vld [vmem:[#allocation5 + $0x1c8] sm:$0xff]
    %v134 = vld [vmem:[#allocation5 + $0x1d0] sm:$0xff]
    %v135 = vld [vmem:[#allocation5 + $0x1d8] sm:$0xff]
    %v136 = vld [vmem:[#allocation5 + $0x1e0] sm:$0xff]
    %v137 = vld [vmem:[#allocation5 + $0x1e8] sm:$0xff]
    %v138 = vld [vmem:[#allocation5 + $0x1f0] sm:$0xff]
    %v139 = vld [vmem:[#allocation5 + $0x1f8] sm:$0xff]
    %v140 = vld [vmem:[#allocation5 + $0x200] sm:$0xff]
    %v141 = vld [vmem:[#allocation5 + $0x208] sm:$0xff]
    %v142 = vld [vmem:[#allocation5 + $0x210] sm:$0xff]
    %v143 = vld [vmem:[#allocation5 + $0x218] sm:$0xff]
    %v144 = vld [vmem:[#allocation5 + $0x220] sm:$0xff]
    %v145 = vld [vmem:[#allocation5 + $0x228] sm:$0xff]
    %v146 = vld [vmem:[#allocation5 + $0x230] sm:$0xff]
    %v147 = vld [vmem:[#allocation5 + $0x238] sm:$0xff]
    %v148 = vld [vmem:[#allocation5 + $0x240] sm:$0xff]
    %v149 = vld [vmem:[#allocation5 + $0x248] sm:$0xff]
    %v150 = vld [vmem:[#allocation5 + $0x250] sm:$0xff]
    %v151 = vld [vmem:[#allocation5 + $0x258] sm:$0xff]
    %v152 = vld [vmem:[#allocation5 + $0x260] sm:$0xff]
    %v153 = vld [vmem:[#allocation5 + $0x268] sm:$0xff]
    %v154 = vld [vmem:[#allocation5 + $0x270] sm:$0xff]
    %v155 = vld [vmem:[#allocation5 + $0x278] sm:$0xff]
    %156 = vmatprep.subr.mxu0 0.0
    %157 = vmatpush1.msra.mxu0 %v91
    %158 = vmatprep.subr.mxu0 0.0
    %159 = vmatpush1.msra.mxu0 %v90
    %160 = vmatprep.subr.mxu0 0.0
    %161 = vmatpush1.msra.mxu0 %v89
    %162 = vmatprep.subr.mxu0 0.0
    %163 = vmatpush1.msra.mxu0 %v88
    %164 = vmatprep.subr.mxu0 0.0
    %165 = vmatpush1.msra.mxu0 %v87
    %166 = vmatprep.subr.mxu0 0.0
    %167 = vmatpush1.msra.mxu0 %v86
    %168 = vmatprep.subr.mxu0 0.0
    %169 = vmatpush1.msra.mxu0 %v85
    %170 = vmatprep.subr.mxu0 0.0
    %171 = vmatpush1.msra.mxu0 %v84
    %172 = vmatprep.subr.mxu0 0.0
    %173 = vmatpush1.msra.mxu0 %v83
    %174 = vmatprep.subr.mxu0 0.0
    %175 = vmatpush1.msra.mxu0 %v82
    %176 = vmatprep.subr.mxu0 0.0
    %177 = vmatpush1.msra.mxu0 %v81
    %178 = vmatprep.subr.mxu0 0.0
    %179 = vmatpush1.msra.mxu0 %v80
    %180 = vmatprep.subr.mxu0 0.0
    %181 = vmatpush1.msra.mxu0 %v79
    %182 = vmatprep.subr.mxu0 0.0
    %183 = vmatpush1.msra.mxu0 %v78
    %184 = vmatprep.subr.mxu0 0.0
    %185 = vmatpush1.msra.mxu0 %v77
    %186 = vmatprep.subr.mxu0 0.0
    %187 = vmatpush1.msra.mxu0 %v76
    %188 = vmatprep.subr.mxu0 0.0
    %189 = vmatpush2.msra.mxu0 %v107
    %190 = vmatprep.subr.mxu0 0.0
    %191 = vmatpush2.msra.mxu0 %v106
    %192 = vmatprep.subr.mxu0 0.0
    %193 = vmatpush2.msra.mxu0 %v105
    %194 = vmatprep.subr.mxu0 0.0
    %195 = vmatpush2.msra.mxu0 %v104
    %196 = vmatprep.subr.mxu0 0.0
    %197 = vmatpush2.msra.mxu0 %v103
    %198 = vmatprep.subr.mxu0 0.0
    %199 = vmatpush2.msra.mxu0 %v102
    %200 = vmatprep.subr.mxu0 0.0
    %201 = vmatpush2.msra.mxu0 %v101
    %202 = vmatprep.subr.mxu0 0.0
    %203 = vmatpush2.msra.mxu0 %v100
    %204 = vmatprep.subr.mxu0 0.0
    %205 = vmatpush2.msra.mxu0 %v99
    %206 = vmatprep.subr.mxu0 0.0
    %207 = vmatpush2.msra.mxu0 %v98
    %208 = vmatprep.subr.mxu0 0.0
    %209 = vmatpush2.msra.mxu0 %v97
    %210 = vmatprep.subr.mxu0 0.0
    %211 = vmatpush2.msra.mxu0 %v96
    %212 = vmatprep.subr.mxu0 0.0
    %213 = vmatpush2.msra.mxu0 %v95
    %214 = vmatprep.subr.mxu0 0.0
    %215 = vmatpush2.msra.mxu0 %v94
    %216 = vmatprep.subr.mxu0 0.0
    %217 = vmatpush2.msra.mxu0 %v93
    %218 = vmatprep.subr.mxu0 0.0
    %219 = vmatpush2.msra.mxu0 %v92
    %220 = vmatprep.mubr.f32.mxu0 %v72
    %221 = vmatmul.mubr.f32.gmra.mxu0 %v71
    %v222 = vpop.f32.mrf.mxu0
    %v223 = vadd.f32 0.0, %v222
    %v224 = vpop.f32.mrf.mxu0
    %225 = vdwg.mxu0
    %226 = vmatprep.subr.mxu0 0.0
    %227 = vmatpush1.msra.mxu0 %v123
    %228 = vmatprep.subr.mxu0 0.0
    %229 = vmatpush1.msra.mxu0 %v122
    %230 = vmatprep.subr.mxu0 0.0
    %231 = vmatpush1.msra.mxu0 %v121
    %232 = vmatprep.subr.mxu0 0.0
    %233 = vmatpush1.msra.mxu0 %v120
    %234 = vmatprep.subr.mxu0 0.0
    %235 = vmatpush1.msra.mxu0 %v119
    %236 = vmatprep.subr.mxu0 0.0
    %237 = vmatpush1.msra.mxu0 %v118
    %238 = vmatprep.subr.mxu0 0.0
    %239 = vmatpush1.msra.mxu0 %v117
    %240 = vmatprep.subr.mxu0 0.0
    %241 = vmatpush1.msra.mxu0 %v116
    %242 = vmatprep.subr.mxu0 0.0
    %243 = vmatpush1.msra.mxu0 %v115
    %244 = vmatprep.subr.mxu0 0.0
    %245 = vmatpush1.msra.mxu0 %v114
    %246 = vmatprep.subr.mxu0 0.0
    %247 = vmatpush1.msra.mxu0 %v113
    %248 = vmatprep.subr.mxu0 0.0
    %249 = vmatpush1.msra.mxu0 %v112
    %250 = vmatprep.subr.mxu0 0.0
    %251 = vmatpush1.msra.mxu0 %v111
    %252 = vmatprep.subr.mxu0 0.0
    %253 = vmatpush1.msra.mxu0 %v110
    %254 = vmatprep.subr.mxu0 0.0
    %255 = vmatpush1.msra.mxu0 %v109
    %256 = vmatprep.subr.mxu0 0.0
    %257 = vmatpush1.msra.mxu0 %v108
    %258 = vmatprep.subr.mxu0 0.0
    %259 = vmatpush2.msra.mxu0 %v139
    %260 = vmatprep.subr.mxu0 0.0
    %261 = vmatpush2.msra.mxu0 %v138
    %262 = vmatprep.subr.mxu0 0.0
    %263 = vmatpush2.msra.mxu0 %v137
    %264 = vmatprep.subr.mxu0 0.0
    %265 = vmatpush2.msra.mxu0 %v136
    %266 = vmatprep.subr.mxu0 0.0
    %267 = vmatpush2.msra.mxu0 %v135
    %268 = vmatprep.subr.mxu0 0.0
    %269 = vmatpush2.msra.mxu0 %v134
    %270 = vmatprep.subr.mxu0 0.0
    %271 = vmatpush2.msra.mxu0 %v133
    %272 = vmatprep.subr.mxu0 0.0
    %273 = vmatpush2.msra.mxu0 %v132
    %274 = vmatprep.subr.mxu0 0.0
    %275 = vmatpush2.msra.mxu0 %v131
    %276 = vmatprep.subr.mxu0 0.0
    %277 = vmatpush2.msra.mxu0 %v130
    %278 = vmatprep.subr.mxu0 0.0
    %279 = vmatpush2.msra.mxu0 %v129
    %280 = vmatprep.subr.mxu0 0.0
    %281 = vmatpush2.msra.mxu0 %v128
    %282 = vmatprep.subr.mxu0 0.0
    %283 = vmatpush2.msra.mxu0 %v127
    %284 = vmatprep.subr.mxu0 0.0
    %285 = vmatpush2.msra.mxu0 %v126
    %286 = vmatprep.subr.mxu0 0.0
    %287 = vmatpush2.msra.mxu0 %v125
    %288 = vmatprep.subr.mxu0 0.0
    %289 = vmatpush2.msra.mxu0 %v124
    %290 = vmatprep.mubr.f32.mxu0 %v74
    %291 = vmatmul.mubr.f32.gmra.mxu0 %v73
    %v292 = vpop.f32.mrf.mxu0
    %v293 = vadd.f32 %v223, %v292
    %v294 = vpop.f32.mrf.mxu0
    %295 = vdwg.mxu0
    %296 = vmatprep.subr.mxu0 0.0
    %297 = vmatpush1.msra.mxu0 %v155
    %298 = vmatprep.subr.mxu0 0.0
    %299 = vmatpush1.msra.mxu0 %v154
    %300 = vmatprep.subr.mxu0 0.0
    %301 = vmatpush1.msra.mxu0 %v153
    %302 = vmatprep.subr.mxu0 0.0
    %303 = vmatpush1.msra.mxu0 %v152
    %304 = vmatprep.subr.mxu0 0.0
    %305 = vmatpush1.msra.mxu0 %v151
    %306 = vmatprep.subr.mxu0 0.0
    %307 = vmatpush1.msra.mxu0 %v150
    %308 = vmatprep.subr.mxu0 0.0
    %309 = vmatpush1.msra.mxu0 %v149
    %310 = vmatprep.subr.mxu0 0.0
    %311 = vmatpush1.msra.mxu0 %v148
    %312 = vmatprep.subr.mxu0 0.0
    %313 = vmatpush1.msra.mxu0 %v147
    %314 = vmatprep.subr.mxu0 0.0
    %315 = vmatpush1.msra.mxu0 %v146
    %316 = vmatprep.subr.mxu0 0.0
    %317 = vmatpush1.msra.mxu0 %v145
    %318 = vmatprep.subr.mxu0 0.0
    %319 = vmatpush1.msra.mxu0 %v144
    %320 = vmatprep.subr.mxu0 0.0
    %321 = vmatpush1.msra.mxu0 %v143
    %322 = vmatprep.subr.mxu0 0.0
    %323 = vmatpush1.msra.mxu0 %v142
    %324 = vmatprep.subr.mxu0 0.0
    %325 = vmatpush1.msra.mxu0 %v141
    %326 = vmatprep.subr.mxu0 0.0
    %327 = vmatpush1.msra.mxu0 %v140
    %328 = vmatprep.subr.mxu0 0.0
    %329 = vmatpush2.msra.mxu0 0.0
    %330 = vmatprep.subr.mxu0 0.0
    %331 = vmatpush2.msra.mxu0 0.0
    %332 = vmatprep.subr.mxu0 0.0
    %333 = vmatpush2.msra.mxu0 0.0
    %334 = vmatprep.subr.mxu0 0.0
    %335 = vmatpush2.msra.mxu0 0.0
    %336 = vmatprep.subr.mxu0 0.0
    %337 = vmatpush2.msra.mxu0 0.0
    %338 = vmatprep.subr.mxu0 0.0
    %339 = vmatpush2.msra.mxu0 0.0
    %340 = vmatprep.subr.mxu0 0.0
    %341 = vmatpush2.msra.mxu0 0.0
    %342 = vmatprep.subr.mxu0 0.0
    %343 = vmatpush2.msra.mxu0 0.0
    %344 = vmatprep.subr.mxu0 0.0
    %345 = vmatpush2.msra.mxu0 0.0
    %346 = vmatprep.subr.mxu0 0.0
    %347 = vmatpush2.msra.mxu0 0.0
    %348 = vmatprep.subr.mxu0 0.0
    %349 = vmatpush2.msra.mxu0 0.0
    %350 = vmatprep.subr.mxu0 0.0
    %351 = vmatpush2.msra.mxu0 0.0
    %352 = vmatprep.subr.mxu0 0.0
    %353 = vmatpush2.msra.mxu0 0.0
    %354 = vmatprep.subr.mxu0 0.0
    %355 = vmatpush2.msra.mxu0 0.0
    %356 = vmatprep.subr.mxu0 0.0
    %357 = vmatpush2.msra.mxu0 0.0
    %358 = vmatprep.subr.mxu0 0.0
    %359 = vmatpush2.msra.mxu0 0.0
    %360 = vmatprep.mubr.f32.mxu0 0.0
    %361 = vmatmul.mubr.f32.gmra.mxu0 %v75
    %v362 = vpop.f32.mrf.mxu0
    %v363 = vadd.f32 %v293, %v362
    %v364 = vpop.f32.mrf.mxu0
    %365 = vdwg.mxu0
    %v366 = vld [vmem:[#allocation7] sm:$0xff]
    %v367 = vld [vmem:[#allocation7 + $0x8] sm:$0xff]
    %v368 = vld [vmem:[#allocation7 + $0x10] sm:$0xff]
    %v369 = vld [vmem:[#allocation7 + $0x18] sm:$0xff]
    %v370 = vld [vmem:[#allocation7 + $0x20] sm:$0xff]
    %v371 = vld [vmem:[#allocation7 + $0x28] sm:$0xff]
    %v372 = vld [vmem:[#allocation7 + $0x30] sm:$0xff]
    %v373 = vld [vmem:[#allocation7 + $0x38] sm:$0xff]
    %v374 = vld [vmem:[#allocation7 + $0x40] sm:$0xff]
    %v375 = vld [vmem:[#allocation7 + $0x48] sm:$0xff]
    %v376 = vld [vmem:[#allocation7 + $0x50] sm:$0xff]
    %v377 = vld [vmem:[#allocation7 + $0x58] sm:$0xff]
    %v378 = vld [vmem:[#allocation7 + $0x60] sm:$0xff]
    %v379 = vld [vmem:[#allocation7 + $0x68] sm:$0xff]
    %v380 = vld [vmem:[#allocation7 + $0x70] sm:$0xff]
    %v381 = vld [vmem:[#allocation7 + $0x78] sm:$0xff]
    %v382 = vld [vmem:[#allocation7 + $0x80] sm:$0xff]
    %v383 = vld [vmem:[#allocation7 + $0x88] sm:$0xff]
    %v384 = vld [vmem:[#allocation7 + $0x90] sm:$0xff]
    %v385 = vld [vmem:[#allocation7 + $0x98] sm:$0xff]
    %v386 = vld [vmem:[#allocation7 + $0xa0] sm:$0xff]
    %v387 = vld [vmem:[#allocation7 + $0xa8] sm:$0xff]
    %v388 = vld [vmem:[#allocation7 + $0xb0] sm:$0xff]
    %v389 = vld [vmem:[#allocation7 + $0xb8] sm:$0xff]
    %v390 = vld [vmem:[#allocation7 + $0xc0] sm:$0xff]
    %v391 = vld [vmem:[#allocation7 + $0xc8] sm:$0xff]
    %v392 = vld [vmem:[#allocation7 + $0xd0] sm:$0xff]
    %v393 = vld [vmem:[#allocation7 + $0xd8] sm:$0xff]
    %v394 = vld [vmem:[#allocation7 + $0xe0] sm:$0xff]
    %v395 = vld [vmem:[#allocation7 + $0xe8] sm:$0xff]
    %v396 = vld [vmem:[#allocation7 + $0xf0] sm:$0xff]
    %v397 = vld [vmem:[#allocation7 + $0xf8] sm:$0xff]
    %v398 = vld [vmem:[#allocation7 + $0x100] sm:$0xff]
    %v399 = vld [vmem:[#allocation7 + $0x108] sm:$0xff]
    %v400 = vld [vmem:[#allocation7 + $0x110] sm:$0xff]
    %v401 = vld [vmem:[#allocation7 + $0x118] sm:$0xff]
    %v402 = vld [vmem:[#allocation7 + $0x120] sm:$0xff]
    %v403 = vld [vmem:[#allocation7 + $0x128] sm:$0xff]
    %v404 = vld [vmem:[#allocation7 + $0x130] sm:$0xff]
    %v405 = vld [vmem:[#allocation7 + $0x138] sm:$0xff]
    %v406 = vld [vmem:[#allocation7 + $0x140] sm:$0xff]
    %v407 = vld [vmem:[#allocation7 + $0x148] sm:$0xff]
    %v408 = vld [vmem:[#allocation7 + $0x150] sm:$0xff]
    %v409 = vld [vmem:[#allocation7 + $0x158] sm:$0xff]
    %v410 = vld [vmem:[#allocation7 + $0x160] sm:$0xff]
    %v411 = vld [vmem:[#allocation7 + $0x168] sm:$0xff]
    %v412 = vld [vmem:[#allocation7 + $0x170] sm:$0xff]
    %v413 = vld [vmem:[#allocation7 + $0x178] sm:$0xff]
    %v414 = vld [vmem:[#allocation7 + $0x180] sm:$0xff]
    %v415 = vld [vmem:[#allocation7 + $0x188] sm:$0xff]
    %v416 = vld [vmem:[#allocation7 + $0x190] sm:$0xff]
    %v417 = vld [vmem:[#allocation7 + $0x198] sm:$0xff]
    %v418 = vld [vmem:[#allocation7 + $0x1a0] sm:$0xff]
    %v419 = vld [vmem:[#allocation7 + $0x1a8] sm:$0xff]
    %v420 = vld [vmem:[#allocation7 + $0x1b0] sm:$0xff]
    %v421 = vld [vmem:[#allocation7 + $0x1b8] sm:$0xff]
    %v422 = vld [vmem:[#allocation7 + $0x1c0] sm:$0xff]
    %v423 = vld [vmem:[#allocation7 + $0x1c8] sm:$0xff]
    %v424 = vld [vmem:[#allocation7 + $0x1d0] sm:$0xff]
    %v425 = vld [vmem:[#allocation7 + $0x1d8] sm:$0xff]
    %v426 = vld [vmem:[#allocation7 + $0x1e0] sm:$0xff]
    %v427 = vld [vmem:[#allocation7 + $0x1e8] sm:$0xff]
    %v428 = vld [vmem:[#allocation7 + $0x1f0] sm:$0xff]
    %v429 = vld [vmem:[#allocation7 + $0x1f8] sm:$0xff]
    %v430 = vld [vmem:[#allocation7 + $0x200] sm:$0xff]
    %v431 = vld [vmem:[#allocation7 + $0x208] sm:$0xff]
    %v432 = vld [vmem:[#allocation7 + $0x210] sm:$0xff]
    %v433 = vld [vmem:[#allocation7 + $0x218] sm:$0xff]
    %v434 = vld [vmem:[#allocation7 + $0x220] sm:$0xff]
    %v435 = vld [vmem:[#allocation7 + $0x228] sm:$0xff]
    %v436 = vld [vmem:[#allocation7 + $0x230] sm:$0xff]
    %v437 = vld [vmem:[#allocation7 + $0x238] sm:$0xff]
    %v438 = vld [vmem:[#allocation7 + $0x240] sm:$0xff]
    %v439 = vld [vmem:[#allocation7 + $0x248] sm:$0xff]
    %v440 = vld [vmem:[#allocation7 + $0x250] sm:$0xff]
    %v441 = vld [vmem:[#allocation7 + $0x258] sm:$0xff]
    %v442 = vld [vmem:[#allocation7 + $0x260] sm:$0xff]
    %v443 = vld [vmem:[#allocation7 + $0x268] sm:$0xff]
    %v444 = vld [vmem:[#allocation7 + $0x270] sm:$0xff]
    %v445 = vld [vmem:[#allocation7 + $0x278] sm:$0xff]
    %446 = vmatprep.subr.mxu0 0.0
    %447 = vmatpush1.msra.mxu0 %v381
    %448 = vmatprep.subr.mxu0 0.0
    %449 = vmatpush1.msra.mxu0 %v380
    %450 = vmatprep.subr.mxu0 0.0
    %451 = vmatpush1.msra.mxu0 %v379
    %452 = vmatprep.subr.mxu0 0.0
    %453 = vmatpush1.msra.mxu0 %v378
    %454 = vmatprep.subr.mxu0 0.0
    %455 = vmatpush1.msra.mxu0 %v377
    %456 = vmatprep.subr.mxu0 0.0
    %457 = vmatpush1.msra.mxu0 %v376
    %458 = vmatprep.subr.mxu0 0.0
    %459 = vmatpush1.msra.mxu0 %v375
    %460 = vmatprep.subr.mxu0 0.0
    %461 = vmatpush1.msra.mxu0 %v374
    %462 = vmatprep.subr.mxu0 0.0
    %463 = vmatpush1.msra.mxu0 %v373
    %464 = vmatprep.subr.mxu0 0.0
    %465 = vmatpush1.msra.mxu0 %v372
    %466 = vmatprep.subr.mxu0 0.0
    %467 = vmatpush1.msra.mxu0 %v371
    %468 = vmatprep.subr.mxu0 0.0
    %469 = vmatpush1.msra.mxu0 %v370
    %470 = vmatprep.subr.mxu0 0.0
    %471 = vmatpush1.msra.mxu0 %v369
    %472 = vmatprep.subr.mxu0 0.0
    %473 = vmatpush1.msra.mxu0 %v368
    %474 = vmatprep.subr.mxu0 0.0
    %475 = vmatpush1.msra.mxu0 %v367
    %476 = vmatprep.subr.mxu0 0.0
    %477 = vmatpush1.msra.mxu0 %v366
    %478 = vmatprep.subr.mxu0 0.0
    %479 = vmatpush2.msra.mxu0 %v397
    %480 = vmatprep.subr.mxu0 0.0
    %481 = vmatpush2.msra.mxu0 %v396
    %482 = vmatprep.subr.mxu0 0.0
    %483 = vmatpush2.msra.mxu0 %v395
    %484 = vmatprep.subr.mxu0 0.0
    %485 = vmatpush2.msra.mxu0 %v394
    %486 = vmatprep.subr.mxu0 0.0
    %487 = vmatpush2.msra.mxu0 %v393
    %488 = vmatprep.subr.mxu0 0.0
    %489 = vmatpush2.msra.mxu0 %v392
    %490 = vmatprep.subr.mxu0 0.0
    %491 = vmatpush2.msra.mxu0 %v391
    %492 = vmatprep.subr.mxu0 0.0
    %493 = vmatpush2.msra.mxu0 %v390
    %494 = vmatprep.subr.mxu0 0.0
    %495 = vmatpush2.msra.mxu0 %v389
    %496 = vmatprep.subr.mxu0 0.0
    %497 = vmatpush2.msra.mxu0 %v388
    %498 = vmatprep.subr.mxu0 0.0
    %499 = vmatpush2.msra.mxu0 %v387
    %500 = vmatprep.subr.mxu0 0.0
    %501 = vmatpush2.msra.mxu0 %v386
    %502 = vmatprep.subr.mxu0 0.0
    %503 = vmatpush2.msra.mxu0 %v385
    %504 = vmatprep.subr.mxu0 0.0
    %505 = vmatpush2.msra.mxu0 %v384
    %506 = vmatprep.subr.mxu0 0.0
    %507 = vmatpush2.msra.mxu0 %v383
    %508 = vmatprep.subr.mxu0 0.0
    %509 = vmatpush2.msra.mxu0 %v382
    %510 = vmatprep.mubr.f32.mxu0 %v72
    %511 = vmatmul.mubr.f32.gmra.mxu0 %v71
    %v512 = vpop.f32.mrf.mxu0
    %v513 = vadd.f32 0.0, %v512
    %v514 = vpop.f32.mrf.mxu0
    %515 = vdwg.mxu0
    %516 = vmatprep.subr.mxu0 0.0
    %517 = vmatpush1.msra.mxu0 %v413
    %518 = vmatprep.subr.mxu0 0.0
    %519 = vmatpush1.msra.mxu0 %v412
    %520 = vmatprep.subr.mxu0 0.0
    %521 = vmatpush1.msra.mxu0 %v411
    %522 = vmatprep.subr.mxu0 0.0
    %523 = vmatpush1.msra.mxu0 %v410
    %524 = vmatprep.subr.mxu0 0.0
    %525 = vmatpush1.msra.mxu0 %v409
    %526 = vmatprep.subr.mxu0 0.0
    %527 = vmatpush1.msra.mxu0 %v408
    %528 = vmatprep.subr.mxu0 0.0
    %529 = vmatpush1.msra.mxu0 %v407
    %530 = vmatprep.subr.mxu0 0.0
    %531 = vmatpush1.msra.mxu0 %v406
    %532 = vmatprep.subr.mxu0 0.0
    %533 = vmatpush1.msra.mxu0 %v405
    %534 = vmatprep.subr.mxu0 0.0
    %535 = vmatpush1.msra.mxu0 %v404
    %536 = vmatprep.subr.mxu0 0.0
    %537 = vmatpush1.msra.mxu0 %v403
    %538 = vmatprep.subr.mxu0 0.0
    %539 = vmatpush1.msra.mxu0 %v402
    %540 = vmatprep.subr.mxu0 0.0
    %541 = vmatpush1.msra.mxu0 %v401
    %542 = vmatprep.subr.mxu0 0.0
    %543 = vmatpush1.msra.mxu0 %v400
    %544 = vmatprep.subr.mxu0 0.0
    %545 = vmatpush1.msra.mxu0 %v399
    %546 = vmatprep.subr.mxu0 0.0
    %547 = vmatpush1.msra.mxu0 %v398
    %548 = vmatprep.subr.mxu0 0.0
    %549 = vmatpush2.msra.mxu0 %v429
    %550 = vmatprep.subr.mxu0 0.0
    %551 = vmatpush2.msra.mxu0 %v428
    %552 = vmatprep.subr.mxu0 0.0
    %553 = vmatpush2.msra.mxu0 %v427
    %554 = vmatprep.subr.mxu0 0.0
    %555 = vmatpush2.msra.mxu0 %v426
    %556 = vmatprep.subr.mxu0 0.0
    %557 = vmatpush2.msra.mxu0 %v425
    %558 = vmatprep.subr.mxu0 0.0
    %559 = vmatpush2.msra.mxu0 %v424
    %560 = vmatprep.subr.mxu0 0.0
    %561 = vmatpush2.msra.mxu0 %v423
    %562 = vmatprep.subr.mxu0 0.0
    %563 = vmatpush2.msra.mxu0 %v422
    %564 = vmatprep.subr.mxu0 0.0
    %565 = vmatpush2.msra.mxu0 %v421
    %566 = vmatprep.subr.mxu0 0.0
    %567 = vmatpush2.msra.mxu0 %v420
    %568 = vmatprep.subr.mxu0 0.0
    %569 = vmatpush2.msra.mxu0 %v419
    %570 = vmatprep.subr.mxu0 0.0
    %571 = vmatpush2.msra.mxu0 %v418
    %572 = vmatprep.subr.mxu0 0.0
    %573 = vmatpush2.msra.mxu0 %v417
    %574 = vmatprep.subr.mxu0 0.0
    %575 = vmatpush2.msra.mxu0 %v416
    %576 = vmatprep.subr.mxu0 0.0
    %577 = vmatpush2.msra.mxu0 %v415
    %578 = vmatprep.subr.mxu0 0.0
    %579 = vmatpush2.msra.mxu0 %v414
    %580 = vmatprep.mubr.f32.mxu0 %v74
    %581 = vmatmul.mubr.f32.gmra.mxu0 %v73
    %v582 = vpop.f32.mrf.mxu0
    %v583 = vadd.f32 %v513, %v582
    %v584 = vpop.f32.mrf.mxu0
    %585 = vdwg.mxu0
    %586 = vmatprep.subr.mxu0 0.0
    %587 = vmatpush1.msra.mxu0 %v445
    %588 = vmatprep.subr.mxu0 0.0
    %589 = vmatpush1.msra.mxu0 %v444
    %590 = vmatprep.subr.mxu0 0.0
    %591 = vmatpush1.msra.mxu0 %v443
    %592 = vmatprep.subr.mxu0 0.0
    %593 = vmatpush1.msra.mxu0 %v442
    %594 = vmatprep.subr.mxu0 0.0
    %595 = vmatpush1.msra.mxu0 %v441
    %596 = vmatprep.subr.mxu0 0.0
    %597 = vmatpush1.msra.mxu0 %v440
    %598 = vmatprep.subr.mxu0 0.0
    %599 = vmatpush1.msra.mxu0 %v439
    %600 = vmatprep.subr.mxu0 0.0
    %601 = vmatpush1.msra.mxu0 %v438
    %602 = vmatprep.subr.mxu0 0.0
    %603 = vmatpush1.msra.mxu0 %v437
    %604 = vmatprep.subr.mxu0 0.0
    %605 = vmatpush1.msra.mxu0 %v436
    %606 = vmatprep.subr.mxu0 0.0
    %607 = vmatpush1.msra.mxu0 %v435
    %608 = vmatprep.subr.mxu0 0.0
    %609 = vmatpush1.msra.mxu0 %v434
    %610 = vmatprep.subr.mxu0 0.0
    %611 = vmatpush1.msra.mxu0 %v433
    %612 = vmatprep.subr.mxu0 0.0
    %613 = vmatpush1.msra.mxu0 %v432
    %614 = vmatprep.subr.mxu0 0.0
    %615 = vmatpush1.msra.mxu0 %v431
    %616 = vmatprep.subr.mxu0 0.0
    %617 = vmatpush1.msra.mxu0 %v430
    %618 = vmatprep.subr.mxu0 0.0
    %619 = vmatpush2.msra.mxu0 0.0
    %620 = vmatprep.subr.mxu0 0.0
    %621 = vmatpush2.msra.mxu0 0.0
    %622 = vmatprep.subr.mxu0 0.0
    %623 = vmatpush2.msra.mxu0 0.0
    %624 = vmatprep.subr.mxu0 0.0
    %625 = vmatpush2.msra.mxu0 0.0
    %626 = vmatprep.subr.mxu0 0.0
    %627 = vmatpush2.msra.mxu0 0.0
    %628 = vmatprep.subr.mxu0 0.0
    %629 = vmatpush2.msra.mxu0 0.0
    %630 = vmatprep.subr.mxu0 0.0
    %631 = vmatpush2.msra.mxu0 0.0
    %632 = vmatprep.subr.mxu0 0.0
    %633 = vmatpush2.msra.mxu0 0.0
    %634 = vmatprep.subr.mxu0 0.0
    %635 = vmatpush2.msra.mxu0 0.0
    %636 = vmatprep.subr.mxu0 0.0
    %637 = vmatpush2.msra.mxu0 0.0
    %638 = vmatprep.subr.mxu0 0.0
    %639 = vmatpush2.msra.mxu0 0.0
    %640 = vmatprep.subr.mxu0 0.0
    %641 = vmatpush2.msra.mxu0 0.0
    %642 = vmatprep.subr.mxu0 0.0
    %643 = vmatpush2.msra.mxu0 0.0
    %644 = vmatprep.subr.mxu0 0.0
    %645 = vmatpush2.msra.mxu0 0.0
    %646 = vmatprep.subr.mxu0 0.0
    %647 = vmatpush2.msra.mxu0 0.0
    %648 = vmatprep.subr.mxu0 0.0
    %649 = vmatpush2.msra.mxu0 0.0
    %650 = vmatprep.mubr.f32.mxu0 0.0
    %651 = vmatmul.mubr.f32.gmra.mxu0 %v75
    %v652 = vpop.f32.mrf.mxu0
    %v653 = vadd.f32 %v583, %v652
    %v654 = vpop.f32.mrf.mxu0
    %655 = vdwg.mxu0
    %v656 = vmax.f32 %v653, 0.0
    %v657 = vld [vmem:[#allocation8] sm:$0xff]
    %v658 = vld [vmem:[#allocation8 + $0x8] sm:$0xff]
    %v659 = vld [vmem:[#allocation8 + $0x10] sm:$0xff]
    %v660 = vld [vmem:[#allocation8 + $0x18] sm:$0xff]
    %v661 = vld [vmem:[#allocation8 + $0x20] sm:$0xff]
    %v662 = vld [vmem:[#allocation8 + $0x28] sm:$0xff]
    %v663 = vld [vmem:[#allocation8 + $0x30] sm:$0xff]
    %v664 = vld [vmem:[#allocation8 + $0x38] sm:$0xff]
    %v665 = vld [vmem:[#allocation8 + $0x40] sm:$0xff]
    %v666 = vld [vmem:[#allocation8 + $0x48] sm:$0xff]
    %v667 = vld [vmem:[#allocation8 + $0x50] sm:$0xff]
    %v668 = vld [vmem:[#allocation8 + $0x58] sm:$0xff]
    %v669 = vld [vmem:[#allocation8 + $0x60] sm:$0xff]
    %v670 = vld [vmem:[#allocation8 + $0x68] sm:$0xff]
    %v671 = vld [vmem:[#allocation8 + $0x70] sm:$0xff]
    %v672 = vld [vmem:[#allocation8 + $0x78] sm:$0xff]
    %673 = vmatprep.subr.mxu0 0.0
    %674 = vmatpush1.msra.mxu0 %v672
    %675 = vmatprep.subr.mxu0 0.0
    %676 = vmatpush1.msra.mxu0 %v671
    %677 = vmatprep.subr.mxu0 0.0
    %678 = vmatpush1.msra.mxu0 %v670
    %679 = vmatprep.subr.mxu0 0.0
    %680 = vmatpush1.msra.mxu0 %v669
    %681 = vmatprep.subr.mxu0 0.0
    %682 = vmatpush1.msra.mxu0 %v668
    %683 = vmatprep.subr.mxu0 0.0
    %684 = vmatpush1.msra.mxu0 %v667
    %685 = vmatprep.subr.mxu0 0.0
    %686 = vmatpush1.msra.mxu0 %v666
    %687 = vmatprep.subr.mxu0 0.0
    %688 = vmatpush1.msra.mxu0 %v665
    %689 = vmatprep.subr.mxu0 0.0
    %690 = vmatpush1.msra.mxu0 %v664
    %691 = vmatprep.subr.mxu0 0.0
    %692 = vmatpush1.msra.mxu0 %v663
    %693 = vmatprep.subr.mxu0 0.0
    %694 = vmatpush1.msra.mxu0 %v662
    %695 = vmatprep.subr.mxu0 0.0
    %696 = vmatpush1.msra.mxu0 %v661
    %697 = vmatprep.subr.mxu0 0.0
    %698 = vmatpush1.msra.mxu0 %v660
    %699 = vmatprep.subr.mxu0 0.0
    %700 = vmatpush1.msra.mxu0 %v659
    %701 = vmatprep.subr.mxu0 0.0
    %702 = vmatpush1.msra.mxu0 %v658
    %703 = vmatprep.subr.mxu0 0.0
    %704 = vmatpush1.msra.mxu0 %v657
    %705 = vmatprep.subr.mxu0 0.0
    %706 = vmatpush2.msra.mxu0 0.0
    %707 = vmatprep.subr.mxu0 0.0
    %708 = vmatpush2.msra.mxu0 0.0
    %709 = vmatprep.subr.mxu0 0.0
    %710 = vmatpush2.msra.mxu0 0.0
    %711 = vmatprep.subr.mxu0 0.0
    %712 = vmatpush2.msra.mxu0 0.0
    %713 = vmatprep.subr.mxu0 0.0
    %714 = vmatpush2.msra.mxu0 0.0
    %715 = vmatprep.subr.mxu0 0.0
    %716 = vmatpush2.msra.mxu0 0.0
    %717 = vmatprep.subr.mxu0 0.0
    %718 = vmatpush2.msra.mxu0 0.0
    %719 = vmatprep.subr.mxu0 0.0
    %720 = vmatpush2.msra.mxu0 0.0
    %721 = vmatprep.subr.mxu0 0.0
    %722 = vmatpush2.msra.mxu0 0.0
    %723 = vmatprep.subr.mxu0 0.0
    %724 = vmatpush2.msra.mxu0 0.0
    %725 = vmatprep.subr.mxu0 0.0
    %726 = vmatpush2.msra.mxu0 0.0
    %727 = vmatprep.subr.mxu0 0.0
    %728 = vmatpush2.msra.mxu0 0.0
    %729 = vmatprep.subr.mxu0 0.0
    %730 = vmatpush2.msra.mxu0 0.0
    %731 = vmatprep.subr.mxu0 0.0
    %732 = vmatpush2.msra.mxu0 0.0
    %733 = vmatprep.subr.mxu0 0.0
    %734 = vmatpush2.msra.mxu0 0.0
    %735 = vmatprep.subr.mxu0 0.0
    %736 = vmatpush2.msra.mxu0 0.0
    %737 = vmatprep.mubr.f32.mxu0 0.0
    %738 = vmatmul.mubr.f32.gmra.mxu0 %v656
    %v739 = vpop.f32.mrf.mxu0
    %v740 = vadd.f32 0.0, %v739
    %v741 = vpop.f32.mrf.mxu0
    %742 = vdwg.mxu0
    %743 = vst [vmem:[#allocation10] sm:$0xff] %v363
    %744 = vst [vmem:[#allocation10 + $0x8] sm:$0xff] %v740
    // Predicated region
    $region34: #{tpu_custom_call.1} parent=1 // pred_check
      _
    $region35: #{tpu_custom_call.1} parent=1 // pred_check_branch
      %746 = sbr.rel (0) target = $region37
    $region36: #{tpu_custom_call.1} parent=1 // pred_region
      %s748 = ssub.s32 256, 256
      %749 = vsyncadd [#allocation4], %s748
      %s751 = sshll.u32 [#allocation10], 4
      %s752 = int_to_ptr.vmem [resolvable:$true] %s751
      %754 = dma.vmem_to_hbm [thread:$0]  %s752, 256, %s4, [#allocation4]
    $region37: #{tpu_custom_call.1} parent=1 // pred_fallthru
      _
    // Predicated region
    $region38: #{tpu_custom_call.1} parent=1 // pred_check
      _
    $region39: #{tpu_custom_call.1} parent=1 // pred_check_branch
      %756 = sbr.rel (0) target = $region41
    $region40: #{tpu_custom_call.1} parent=1 // pred_region
      %757 = dma.done [#allocation4], 256
    $region41: #{tpu_custom_call.1} parent=1 // pred_fallthru
      _
    %758 = vsyncpa [#allocation3], 1
    %759 = vsyncpa [#allocation6], 1
    %760 = vsyncpa [#allocation9], 1
    %761 = vsyncpa [#allocation4], 1

</llo_original>
